<compile_context>
chip_gen: v5e
topology: v5e:2x2
jax: 0.10.0
libtpu: 0.0.40
codegen_flags: <defaults>
</compile_context>

<pallas_src>
import math
import functools

import jax
import jax.numpy as jnp
from jax.experimental import pallas as pl
from jax.experimental.pallas import tpu as pltpu


def _round_up(v, m):
    return (v + m - 1) // m * m


def _vmem_limit_bytes():
    """Generation-aware scoped-VMEM limit: ~3/4 of physical, capped at 96 MiB."""
    cap = 64 * 1024 * 1024  # conservative default (v7x physical)
    try:
        cap = int(pltpu.get_tpu_info().vmem_capacity_bytes)
    except Exception:
        pass
    return min((cap * 3) // 4, 96 * 1024 * 1024)


def _embed_kernel_fullk(x_ref, w_ref, b_ref, o_ref, *, scale):
    """One (tm, tn) output tile, full-K contraction in a single MXU dot."""
    acc = jnp.dot(x_ref[...], w_ref[...], preferred_element_type=jnp.float32)
    o_ref[...] = ((acc + b_ref[...]) * scale).astype(o_ref.dtype)


def _embed_kernel_ksplit(x_ref, w_ref, b_ref, o_ref, *, scale):
    """K-split fallback: accumulate directly into the resident f32 output block."""
    k = pl.program_id(2)

    @pl.when(k == 0)
    def _():
        o_ref[...] = jnp.zeros_like(o_ref)

    o_ref[...] += jnp.dot(x_ref[...], w_ref[...],
                          preferred_element_type=jnp.float32)

    @pl.when(k == pl.num_programs(2) - 1)
    def _():
        o_ref[...] = (o_ref[...] + b_ref[...]) * scale


def embeddings_forward(x, weight, bias, *, use_bf16_matmul=False):
    """y = (x @ weight.T + bias) * sqrt(dim_d); weight is PyTorch (dim_d, dim_in)."""
    # Module semantics: x.float() -> compute in f32.
    x = x.astype(jnp.float32)
    weight = weight.astype(jnp.float32)
    bias = bias.astype(jnp.float32)

    dim_d, dim_in = weight.shape
    scale = math.sqrt(float(dim_d))

    lead_shape = x.shape[:-1]
    m = 1
    for s in lead_shape:
        m *= int(s)
    x2d = x.reshape(m, dim_in)
    w_t = weight.T                      # (K, N): one small wrapper pass, no per-tile transpose
    b2d = bias.reshape(1, dim_d)

    if use_bf16_matmul:
        # TODO(synk): opt-in only -- deviates from the module's x.float() numerics.
        x2d = x2d.astype(jnp.bfloat16)
        w_t = w_t.astype(jnp.bfloat16)
    itemsize = 2 if use_bf16_matmul else 4

    vmem_limit = _vmem_limit_bytes()
    budget = vmem_limit - 4 * 1024 * 1024   # headroom for compiler-internal scratch

    # ---- N tile: keep the whole feature dim per tile (lane axis) when feasible;
    # weight stays fully resident across the M loop. ---------------------------
    tn = dim_d if dim_d <= 1024 else 512      # 512 is a multiple of 128 (valid block)
    n_tiles = pl.cdiv(dim_d, tn)

    tm_cap = max(_round_up(m, 8), 8)

    def tile_bytes(tm, kblk):
        # double-buffered x + weight input tiles, double-buffered f32 output, bias
        return (2 * tm * kblk * itemsize + 2 * kblk * tn * itemsize
                + 2 * tm * tn * 4 + 2 * tn * 4)

    # ---- M tile: largest 8-aligned tile (<=1024) whose full-K working set fits.
    tm_fullk = None
    for cand in (1024, 512, 256, 128, 64, 32, 16, 8):
        c = min(cand, tm_cap)
        if tile_bytes(c, dim_in) <= budget:
            tm_fullk = c
            break

    cost = pl.CostEstimate(
        flops=2 * m * dim_in * dim_d,
        transcendentals=0,
        bytes_accessed=(m * dim_in + dim_d * dim_in) * itemsize
        + 4 * (dim_d + m * dim_d),
    )

    if tm_fullk is not None:
        # -------- Fast path: 2-D grid (N outer, M inner), single dot per tile.
        tm = tm_fullk
        grid = (n_tiles, pl.cdiv(m, tm))
        out = pl.pallas_call(
            functools.partial(_embed_kernel_fullk, scale=scale),
            out_shape=jax.ShapeDtypeStruct((m, dim_d), jnp.float32),
            grid_spec=pltpu.PrefetchScalarGridSpec(
                num_scalar_prefetch=0,
                grid=grid,
                in_specs=[
                    pl.BlockSpec((tm, dim_in), lambda j, i: (i, 0)),   # x  (M, K)
                    pl.BlockSpec((dim_in, tn), lambda j, i: (0, j)),   # w  (K, N) resident over M
                    pl.BlockSpec((1, tn), lambda j, i: (0, j)),        # bias (1, N)
                ],
                out_specs=pl.BlockSpec((tm, tn), lambda j, i: (i, j)),
            ),
            compiler_params=pltpu.CompilerParams(
                dimension_semantics=("parallel", "parallel"),
                vmem_limit_bytes=vmem_limit,
            ),
            cost_estimate=cost,
        )(x2d, w_t, b2d)
    else:
        # -------- Fallback for very large dim_in: split K, accumulate into o_ref.
        tk = 2048
        while tk > 128 and tile_bytes(8, tk) > budget:
            tk //= 2
        tm = 8
        for cand in (1024, 512, 256, 128, 64, 32, 16, 8):
            c = min(cand, tm_cap)
            if tile_bytes(c, tk) <= budget:
                tm = c
                break
        # K (contraction) padding must be zero-filled; M/N padding is unnecessary
        # (partial trailing blocks are masked on write).
        k_pad = _round_up(dim_in, tk)
        if k_pad != dim_in:
            x2d = jnp.pad(x2d, ((0, 0), (0, k_pad - dim_in)))
            w_t = jnp.pad(w_t, ((0, k_pad - dim_in), (0, 0)))
        grid = (n_tiles, pl.cdiv(m, tm), k_pad // tk)
        out = pl.pallas_call(
            functools.partial(_embed_kernel_ksplit, scale=scale),
            out_shape=jax.ShapeDtypeStruct((m, dim_d), jnp.float32),
            grid_spec=pltpu.PrefetchScalarGridSpec(
                num_scalar_prefetch=0,
                grid=grid,
                in_specs=[
                    pl.BlockSpec((tm, tk), lambda j, i, k: (i, k)),    # x  (M, K)
                    pl.BlockSpec((tk, tn), lambda j, i, k: (k, j)),    # w  (K, N)
                    pl.BlockSpec((1, tn), lambda j, i, k: (0, j)),     # bias
                ],
                out_specs=pl.BlockSpec((tm, tn), lambda j, i, k: (i, j)),
            ),
            compiler_params=pltpu.CompilerParams(
                dimension_semantics=("parallel", "parallel", "arbitrary"),
                vmem_limit_bytes=vmem_limit,
            ),
            cost_estimate=cost,
        )(x2d, w_t, b2d)

    return out.reshape(*lead_shape, dim_d)


if __name__ == "__main__":
    # Small shapes consistent with the module (Linear over the last axis).
    batch, seq, dim_in, dim_d = 2, 8, 16, 32

    key = jax.random.PRNGKey(0)
    kx, kw, kb = jax.random.split(key, 3)

    x = jax.random.normal(kx, (batch, seq, dim_in), dtype=jnp.float32)

    # Deterministic PyTorch-style Linear init: U(-1/sqrt(dim_in), 1/sqrt(dim_in)).
    bound = 1.0 / math.sqrt(dim_in)
    weight = jax.random.uniform(kw, (dim_d, dim_in), jnp.float32, -bound, bound)
    bias = jax.random.uniform(kb, (dim_d,), jnp.float32, -bound, bound)

    out = embeddings_forward(x, weight, bias)
    jax.block_until_ready(out)

    # Reference check against plain JAX.
    ref = (x @ weight.T + bias) * math.sqrt(dim_d)
    assert out.shape == (batch, seq, dim_d)
    assert jnp.allclose(out, ref, atol=1e-4, rtol=1e-4)

    print("KERNEL_OK")
</pallas_src>

<mosaic_0001>
module attributes {stable_mosaic.version = 11 : i64} {
  func.func @_embed_kernel_fullk(%arg0: i32, %arg1: i32, %arg2: memref<16x16xf32, #tpu.memory_space<vmem>>, %arg3: memref<16x32xf32, #tpu.memory_space<vmem>>, %arg4: memref<1x32xf32, #tpu.memory_space<vmem>>, %arg5: memref<16x32xf32, #tpu.memory_space<vmem>>) attributes {dimension_semantics = [#tpu.dimension_semantics<parallel>, #tpu.dimension_semantics<parallel>], iteration_bounds = array<i64: 1, 1>, scalar_prefetch = 0 : i64, scratch_operands = 0 : i64, tpu.core_type = #tpu.core_type<tc>, window_params = [{transform_indices = @transform_0, window_bounds = array<i64: 16, 16>}, {transform_indices = @transform_1, window_bounds = array<i64: 16, 32>}, {transform_indices = @transform_2, window_bounds = array<i64: 1, 32>}, {transform_indices = @transform_3, window_bounds = array<i64: 16, 32>}]} {
    %c0 = arith.constant 0 : index
    %c0_0 = arith.constant 0 : index
    %0 = vector.load %arg2[%c0, %c0_0] : memref<16x16xf32, #tpu.memory_space<vmem>>, vector<16x16xf32>
    %c0_1 = arith.constant 0 : index
    %c0_2 = arith.constant 0 : index
    %1 = vector.load %arg3[%c0_1, %c0_2] : memref<16x32xf32, #tpu.memory_space<vmem>>, vector<16x32xf32>
    %cst = arith.constant dense<0.000000e+00> : vector<16x32xf32>
    %2 = tpu.matmul %0, %1, %cst {dimension_numbers = #tpu.dot_dimension_numbers<[1], [0], [0], [1], [0, 0, 1, 1], [], []>} : vector<16x16xf32>, vector<16x32xf32>, vector<16x32xf32> -> vector<16x32xf32>
    %c0_3 = arith.constant 0 : index
    %c0_4 = arith.constant 0 : index
    %3 = vector.load %arg4[%c0_3, %c0_4] : memref<1x32xf32, #tpu.memory_space<vmem>>, vector<1x32xf32>
    %4 = vector.broadcast %3 : vector<1x32xf32> to vector<16x32xf32>
    %5 = arith.addf %2, %4 : vector<16x32xf32>
    %cst_5 = arith.constant 5.65685415 : f32
    %6 = vector.broadcast %cst_5 : f32 to vector<16x32xf32>
    %7 = arith.mulf %5, %6 : vector<16x32xf32>
    %c0_6 = arith.constant 0 : index
    %c0_7 = arith.constant 0 : index
    %8 = vector.load %arg5[%c0_6, %c0_7] : memref<16x32xf32, #tpu.memory_space<vmem>>, vector<16x32xf32>
    tpu.vector_store %arg5[%c0_6, %c0_7], %7 {strides = array<i32>} : memref<16x32xf32, #tpu.memory_space<vmem>>, vector<16x32xf32>,
    return
  }
  func.func @transform_0(%arg0: i32, %arg1: i32) -> (i32, i32) {
    %c0_i32 = arith.constant 0 : i32
    %c0_i32_0 = arith.constant 0 : i32
    return %arg1, %c0_i32 : i32, i32
  }
  func.func @transform_1(%arg0: i32, %arg1: i32) -> (i32, i32) {
    %c0_i32 = arith.constant 0 : i32
    %c0_i32_0 = arith.constant 0 : i32
    return %c0_i32, %arg0 : i32, i32
  }
  func.func @transform_2(%arg0: i32, %arg1: i32) -> (i32, i32) {
    %c0_i32 = arith.constant 0 : i32
    %c0_i32_0 = arith.constant 0 : i32
    return %c0_i32, %arg0 : i32, i32
  }
  func.func @transform_3(%arg0: i32, %arg1: i32) -> (i32, i32) {
    %c0_i32 = arith.constant 0 : i32
    return %arg1, %arg0 : i32, i32
  }
}

</mosaic_0001>

<llo_original>
// kernel: tpu_custom_call.1
$region0: #{tpu_custom_call.1}
  #allocation0 [shape = 'u32[]', space=smem, size = 0x4, offset = 0x4, fixed_abs, tag = 'smem constant byte address 0x4 - core index']
  #allocation1 [shape = 'u32[72,128]{1,0:T(1,128)}', space=vmem, size = 0x9000, scoped, tag = 'internal scratch']
  %s0 = inlined_call_operand.hbm [shape: f32[16,16], index: 0, kind: input, shape index: {}]
  %s1 = inlined_call_operand.hbm [shape: f32[16,32], index: 1, kind: input, shape index: {}]
  %s2 = inlined_call_operand.vmem [shape: f32[1,32], index: 2, kind: input, shape index: {}]
  %s3 = inlined_call_operand.hbm [shape: f32[16,32], index: 3, kind: output, shape index: {}]
  %s4 = sld [smem:[#allocation0]]
  $region30: #{tpu_custom_call.1} parent=0
    _
  %s6 = ssub.s32 1, %s4
  %s7 = scalar_select 0, %s6, %s4
  $region1: #{tpu_custom_call.1} parent=0
    #allocation2 [shape = 'u8[8192]{0}', space=vmem, size = 0x2000, scoped, tag = 'input window, operand 0, single buffered']
    #allocation3 [shape = 's32[1]{0}', space=sflag, size = 0x4, scoped, tag = 'scoped memory for tpu_custom_call.1']
    #allocation4 [shape = 's32[1]{0}', space=sflag, size = 0x4, scoped, tag = 'scoped memory for tpu_custom_call.1']
    #allocation5 [shape = 'u8[8192]{0}', space=vmem, size = 0x2000, scoped, tag = 'input window, operand 1, single buffered']
    #allocation6 [shape = 's32[1]{0}', space=sflag, size = 0x4, scoped, tag = 'scoped memory for tpu_custom_call.1']
    #allocation7 [shape = 'u8[8192]{0}', space=vmem, size = 0x2000, scoped, tag = 'output window, operand 0, single buffered']
    %8 = vsyncpa [#allocation3], 0
    %9 = vsyncpa [#allocation6], 0
    %10 = vsyncpa [#allocation4], 0
    // Predicated region
    $region2: #{tpu_custom_call.1} parent=1 // pred_check
      _
    $region3: #{tpu_custom_call.1} parent=1 // pred_check_branch
      %12 = sbr.rel (0) target = $region5
    $region4: #{tpu_custom_call.1} parent=1 // pred_region
      %14 = vsyncadd [#allocation3], 0
      %s15 = sshll.u32 %s0, 4
      %s16 = int_to_ptr.hbm [resolvable:$true] %s15
      %s17 = sshll.u32 [#allocation2], 4
      %s18 = int_to_ptr.vmem [resolvable:$true] %s17
      %23 = dma.hbm_to_vmem [thread:$0]  %s16, 256, %s18, [#allocation3], 128, 128, 8
    $region5: #{tpu_custom_call.1} parent=1 // pred_fallthru
      _
    // Predicated region
    $region6: #{tpu_custom_call.1} parent=1 // pred_check
      _
    $region7: #{tpu_custom_call.1} parent=1 // pred_check_branch
      %25 = sbr.rel (0) target = $region9
    $region8: #{tpu_custom_call.1} parent=1 // pred_region
      %27 = vsyncadd [#allocation6], 0
      %s28 = sshll.u32 %s1, 4
      %s29 = int_to_ptr.hbm [resolvable:$true] %s28
      %s30 = sshll.u32 [#allocation5], 4
      %s31 = int_to_ptr.vmem [resolvable:$true] %s30
      %36 = dma.hbm_to_vmem [thread:$0]  %s29, 256, %s31, [#allocation6], 128, 128, 8
    $region9: #{tpu_custom_call.1} parent=1 // pred_fallthru
      _
    // Predicated region
    $region10: #{tpu_custom_call.1} parent=1 // pred_check
      _
    $region11: #{tpu_custom_call.1} parent=1 // pred_check_branch
      %38 = sbr.rel (0) target = $region13
    $region12: #{tpu_custom_call.1} parent=1 // pred_region
      _
    $region13: #{tpu_custom_call.1} parent=1 // pred_fallthru
      _
    // Predicated region
    $region14: #{tpu_custom_call.1} parent=1 // pred_check
      _
    $region15: #{tpu_custom_call.1} parent=1 // pred_check_branch
      %40 = sbr.rel (0) target = $region17
    $region16: #{tpu_custom_call.1} parent=1 // pred_region
      %42 = dma.done [#allocation3], 256
    $region17: #{tpu_custom_call.1} parent=1 // pred_fallthru
      _
    // Predicated region
    $region18: #{tpu_custom_call.1} parent=1 // pred_check
      _
    $region19: #{tpu_custom_call.1} parent=1 // pred_check_branch
      %44 = sbr.rel (0) target = $region21
    $region20: #{tpu_custom_call.1} parent=1 // pred_region
      %46 = dma.done [#allocation6], 256
    $region21: #{tpu_custom_call.1} parent=1 // pred_fallthru
      _
    %v47 = vld [vmem:[#allocation2] sm:$0xff]
    %v48 = vld [vmem:[#allocation2 + $0x8] sm:$0xff]
    %v49 = vld [vmem:[#allocation5] sm:$0xff]
    %v50 = vld [vmem:[#allocation5 + $0x8] sm:$0xff]
    %v51 = vld [vmem:[%s2] sm:$0x1]
    %v53 = vperm.slane %v51, 0
    %vm55 = vcmask 130048
    %v57 = vsel %vm55, %v47, 0
    %v60 = vsel %vm55, %v48, 0
    %62 = vmatpush.msra.mxu0 0.0
    %63 = vmatpush.msra.mxu0 0.0
    %64 = vmatpush.msra.mxu0 0.0
    %65 = vmatpush.msra.mxu0 0.0
    %66 = vmatpush.msra.mxu0 0.0
    %67 = vmatpush.msra.mxu0 0.0
    %68 = vmatpush.msra.mxu0 0.0
    %69 = vmatpush.msra.mxu0 0.0
    %70 = vmatpush.msra.mxu0 0.0
    %71 = vmatpush.msra.mxu0 0.0
    %72 = vmatpush.msra.mxu0 0.0
    %73 = vmatpush.msra.mxu0 0.0
    %74 = vmatpush.msra.mxu0 0.0
    %75 = vmatpush.msra.mxu0 0.0
    %76 = vmatpush.msra.mxu0 %v50
    %77 = vmatpush.msra.mxu0 %v49
    %78 = vmatmul.f32.gmra.mxu0 %v57
    %v79 = vpop.f32.mrf.mxu0
    %v80 = vadd.f32 %v53, %v79
    %81 = vmatmul.f32.gmra.mxu0 %v60
    %v82 = vpop.f32.mrf.mxu0
    %v83 = vadd.f32 %v53, %v82
    %84 = vdwg.mxu0
    %v85 = vmul.f32 %v80, 5.656854
    %v86 = vmul.f32 %v83, 5.656854
    %vm87 = vcmask 261120
    %88 = vst.msk [vmem:[#allocation7] sm:$0xff] %vm87, %v85
    %89 = vst.msk [vmem:[#allocation7 + $0x8] sm:$0xff] %vm87, %v86
    // Predicated region
    $region22: #{tpu_custom_call.1} parent=1 // pred_check
      _
    $region23: #{tpu_custom_call.1} parent=1 // pred_check_branch
      %91 = sbr.rel (0) target = $region25
    $region24: #{tpu_custom_call.1} parent=1 // pred_region
      %93 = vsyncadd [#allocation4], 0
      %s94 = sshll.u32 [#allocation7], 4
      %s95 = int_to_ptr.vmem [resolvable:$true] %s94
      %s96 = sshll.u32 %s3, 4
      %s97 = int_to_ptr.hbm [resolvable:$true] %s96
      %102 = dma.vmem_to_hbm [thread:$0]  %s95, 256, %s97, [#allocation4], 128, 128, 8
    $region25: #{tpu_custom_call.1} parent=1 // pred_fallthru
      _
    // Predicated region
    $region26: #{tpu_custom_call.1} parent=1 // pred_check
      _
    $region27: #{tpu_custom_call.1} parent=1 // pred_check_branch
      %104 = sbr.rel (0) target = $region29
    $region28: #{tpu_custom_call.1} parent=1 // pred_region
      %106 = dma.done [#allocation4], 256
    $region29: #{tpu_custom_call.1} parent=1 // pred_fallthru
      _
    %107 = vsyncpa [#allocation3], 1
    %108 = vsyncpa [#allocation6], 1
    %109 = vsyncpa [#allocation4], 1

</llo_original>
